<compile_context>
chip_gen: v7x
topology: tpu7x:2x2x1
jax: 0.10.0
libtpu: 0.0.40
codegen_flags: <defaults>
</compile_context>

<pallas_src>
import jax
import jax.numpy as jnp
from jax.experimental import pallas as pl
from jax.experimental.pallas import tpu as pltpu


def _round_up(x, m):
    return -(-x // m) * m


def _cdiv(a, b):
    return -(-a // b)


def _tail_kernel_single(x_ref, w_ref, b_ref, o_ref):
    """Single C-block case (common ResNet tail): one pass, no accumulator.

    x_ref: (TN, C, HW)   input tile, HW on the lane axis
    w_ref: (1, C)        full fc weight (grid-invariant -> VMEM resident)
    b_ref: (1, 1)        fc bias (SMEM scalar)
    o_ref: (TN, 1)       output tile
    """
    pooled = jnp.max(x_ref[...], axis=2)                          # (TN, C)
    w = w_ref[...].astype(jnp.float32)                            # (1, C)
    s = jnp.sum(pooled.astype(jnp.float32) * w, axis=-1, keepdims=True)
    o_ref[...] = (s + b_ref[0, 0].astype(jnp.float32)).astype(o_ref.dtype)


def _tail_kernel_tiled(x_ref, w_ref, b_ref, o_ref, acc_ref):
    """C-tiled case: (n, c) grid with a C-reduction accumulator.

    x_ref  : (TN, TC, HW)  input tile
    w_ref  : (1, TC)       fc weight slice for this C tile
    b_ref  : (1, 1)        fc bias (SMEM scalar)
    o_ref  : (TN, 1)       output tile (written only on the last C step)
    acc_ref: (TN, 1) f32   partial weighted-sum accumulator across C tiles
    """
    c_idx = pl.program_id(1)

    @pl.when(c_idx == 0)
    def _():
        acc_ref[...] = jnp.zeros_like(acc_ref)

    pooled = jnp.max(x_ref[...], axis=2)                          # (TN, TC)
    w = w_ref[...].astype(jnp.float32)                            # (1, TC)
    acc_ref[...] += jnp.sum(pooled.astype(jnp.float32) * w,
                            axis=-1, keepdims=True)               # (TN, 1)

    @pl.when(c_idx == pl.num_programs(1) - 1)
    def _():
        o_ref[...] = (acc_ref[...] + b_ref[0, 0].astype(jnp.float32)
                      ).astype(o_ref.dtype)


def _vmem_capacity_bytes():
    """Physical VMEM per TensorCore (best effort; conservative default = v7x's 64 MiB)."""
    try:
        info = pltpu.get_tpu_info()
        for attr in ("vmem_capacity_bytes", "vmem_bytes", "vmem_size_bytes"):
            v = getattr(info, attr, None)
            if v:
                return int(v)
    except Exception:
        pass
    return 64 << 20


def _choose_tiles(N, C, HW, itemsize, budget):
    """Pick (tn, tc) for an x block of shape (tn, tc, HW) within `budget` bytes."""
    hw_pad = _round_up(HW, 128)          # HW sits on the 128-lane axis
    tn_min = N if N < 8 else 8           # output block (tn, 1): tn == N or tn % 8 == 0

    def block_bytes(tn, tc):
        return tn * _round_up(tc, 8) * hw_pad * itemsize

    # Channel tile: full extent if a minimal block fits the budget; otherwise tile
    # C in 128-multiples that divide C evenly (so no padded channels can leak into
    # the weighted sum, and the (1, tc) weight block keeps a 128-aligned lane dim).
    tc = C
    if block_bytes(tn_min, C) > budget and C % 128 == 0:
        tc = 128
        d = 256
        while d <= C:
            if C % d == 0 and block_bytes(tn_min, d) <= budget:
                tc = d
            d += 128
    # TODO(synk): for very large HW with C not a multiple of 128, add an HW-reduction
    # grid axis with a running-max accumulator instead of full-HW lane blocks.

    # Batch tile: largest output-aligned tn that stays within the budget (never
    # rounded up past it, except in the fallback where the caller grows vmem_limit
    # from the actual block size).
    tn = budget // block_bytes(1, tc)
    if tn >= N:
        tn = N
    elif tn >= 8:
        tn = (tn // 8) * 8
    else:
        tn = tn_min

    # Give the parallel N axis several blocks so v7x's 2 TensorCores both get work
    # (only when that keeps the output block alignment and tiles reasonably sized).
    if tn == N and N >= 16:
        tn = max(8, _round_up(_cdiv(N, 4), 8))
    # TODO(synk): for tiny batches on v7x, split C (or HW) 2-way with
    # pltpu.CORE_PARALLEL and combine the per-core partial sums in a second pass.

    return int(tn), int(tc), hw_pad


def resnet_tail_forward(x_nchw, weight, bias, *, x_block_budget_bytes=None):
    """Pallas equivalent of resnet_tail.forward.

    x_nchw: (N, C, H, W); weight: (1, C); bias: (1,).  Returns (N, 1).
    """
    N, C, H, W = x_nchw.shape
    HW = H * W
    itemsize = jnp.dtype(x_nchw.dtype).itemsize
    w_itemsize = jnp.dtype(weight.dtype).itemsize

    # Native-layout view: (N, C, HW) is a free reshape of contiguous NCHW.
    x = x_nchw.reshape(N, C, HW)
    b2 = bias.reshape(1, 1)

    # Generation-aware budgets: v5e/v6e have 128 MiB physical VMEM (bigger tiles
    # amortize the ~0.35us/step overhead); v7x has only 64 MiB per core, so keep
    # the double-buffered footprint comfortably under ~40 MiB there.
    phys_vmem = _vmem_capacity_bytes()
    big_vmem = phys_vmem >= (100 << 20)
    if x_block_budget_bytes is None:
        x_block_budget_bytes = (24 << 20) if big_vmem else (8 << 20)
    soft_cap = (64 << 20) if big_vmem else (32 << 20)

    tn, tc, hw_pad = _choose_tiles(N, C, HW, itemsize, x_block_budget_bytes)
    grid_n = _cdiv(N, tn)
    grid_c = C // tc

    # Scoped-VMEM limit derived from the ACTUAL chosen block sizes (2-deep pipeline),
    # so the declared limit always covers what the kernel allocates.
    x_block_bytes = tn * _round_up(tc, 8) * hw_pad * itemsize
    vmem_needed = (2 * x_block_bytes                               # double-buffered x
                   + 2 * 8 * _round_up(tc, 128) * w_itemsize       # weight blocks
                   + 2 * _round_up(tn, 8) * 128 * itemsize         # output blocks
                   + _round_up(tn, 8) * 128 * 4                    # f32 accumulator
                   + (2 << 20))                                    # headroom
    vmem_limit = int(min(max(vmem_needed, 16 << 20), soft_cap))
    if vmem_needed > vmem_limit:
        # Fallback shapes (e.g. C not tileable): grow toward physical VMEM.
        vmem_limit = int(min(vmem_needed, (phys_vmem * 3) // 4))

    cost = pl.CostEstimate(
        flops=int(2 * N * C * HW),     # max compares + mul/add: tiny vs. bytes
        transcendentals=0,
        bytes_accessed=int(N * C * HW * itemsize + C * w_itemsize + 4 + N * itemsize),
    )

    if grid_c == 1:
        # Common ResNet-tail case: all channels in one block -> no accumulator,
        # no pl.when; the weight block index is constant so it stays VMEM resident.
        grid = (grid_n,)
        in_specs = [
            pl.BlockSpec((tn, C, HW), lambda n: (n, 0, 0)),            # x
            pl.BlockSpec((1, C), lambda n: (0, 0)),                    # fc weight
            pl.BlockSpec(memory_space=pltpu.MemorySpace.SMEM),         # fc bias
        ]
        out_specs = pl.BlockSpec((tn, 1), lambda n: (n, 0))
        scratch_shapes = []
        kernel = _tail_kernel_single
        dims = ("parallel",)
    else:
        grid = (grid_n, grid_c)                                        # reduction last
        in_specs = [
            pl.BlockSpec((tn, tc, HW), lambda n, c: (n, c, 0)),        # x
            pl.BlockSpec((1, tc), lambda n, c: (0, c)),                # fc weight slice
            pl.BlockSpec(memory_space=pltpu.MemorySpace.SMEM),         # fc bias
        ]
        out_specs = pl.BlockSpec((tn, 1), lambda n, c: (n, 0))
        scratch_shapes = [pltpu.VMEM((tn, 1), jnp.float32)]
        kernel = _tail_kernel_tiled
        dims = ("parallel", "arbitrary")

    return pl.pallas_call(
        kernel,
        out_shape=jax.ShapeDtypeStruct((N, 1), x_nchw.dtype),
        grid_spec=pltpu.PrefetchScalarGridSpec(
            num_scalar_prefetch=0,
            grid=grid,
            in_specs=in_specs,
            out_specs=out_specs,
            scratch_shapes=scratch_shapes,
        ),
        compiler_params=pltpu.CompilerParams(
            dimension_semantics=dims,
            vmem_limit_bytes=vmem_limit,
        ),
        cost_estimate=cost,
    )(x, weight, b2)


if __name__ == "__main__":
    key = jax.random.PRNGKey(0)
    kx, kw, kb = jax.random.split(key, 3)

    def reference(x, w, b):
        return jnp.max(x, axis=(2, 3)) @ w.T + b                      # (N, 1)

    # 1) Small shapes consistent with the module (batch=2, channels=4, 16x16).
    N, C, H, W = 2, 4, 16, 16
    x = jax.random.normal(kx, (N, C, H, W), dtype=jnp.float32)
    weight = jax.random.normal(kw, (1, C), dtype=jnp.float32) * 0.1   # (out=1, in=C)
    bias = jax.random.normal(kb, (1,), dtype=jnp.float32) * 0.1
    out = jax.block_until_ready(resnet_tail_forward(x, weight, bias))
    assert out.shape == (N, 1)
    assert jnp.allclose(out, reference(x, weight, bias), atol=1e-5, rtol=1e-5)

    # 2) Non-lane-aligned spatial size (HW = 49): checks padded-lane masking of the max.
    N2, C2, H2, W2 = 3, 8, 7, 7
    x2 = jax.random.normal(kx, (N2, C2, H2, W2), dtype=jnp.float32)
    w2 = jax.random.normal(kw, (1, C2), dtype=jnp.float32) * 0.1
    b2 = jax.random.normal(kb, (1,), dtype=jnp.float32) * 0.1
    out2 = jax.block_until_ready(resnet_tail_forward(x2, w2, b2))
    assert out2.shape == (N2, 1)
    assert jnp.allclose(out2, reference(x2, w2, b2), atol=1e-5, rtol=1e-5)

    # 3) Force the C-tiled accumulator path with a tiny VMEM budget (C=256 -> 2 tiles).
    N3, C3, H3, W3 = 2, 256, 4, 4
    x3 = jax.random.normal(kx, (N3, C3, H3, W3), dtype=jnp.float32)
    w3 = jax.random.normal(kw, (1, C3), dtype=jnp.float32) * 0.05
    b3 = jax.random.normal(kb, (1,), dtype=jnp.float32) * 0.1
    out3 = jax.block_until_ready(
        resnet_tail_forward(x3, w3, b3, x_block_budget_bytes=128 << 10))
    assert out3.shape == (N3, 1)
    assert jnp.allclose(out3, reference(x3, w3, b3), atol=1e-4, rtol=1e-4)

    print("KERNEL_OK")
</pallas_src>

<mosaic_0001>
module attributes {stable_mosaic.version = 11 : i64} {
  func.func @_tail_kernel_single(%arg0: i32, %arg1: memref<2x4x256xf32, #tpu.memory_space<vmem>>, %arg2: memref<1x4xf32, #tpu.memory_space<vmem>>, %arg3: memref<1x1xf32, #tpu.memory_space<smem>>, %arg4: memref<2x1xf32, #tpu.memory_space<vmem>>) attributes {dimension_semantics = [#tpu.dimension_semantics<parallel>], iteration_bounds = array<i64: 1>, scalar_prefetch = 0 : i64, scratch_operands = 0 : i64, tpu.core_type = #tpu.core_type<tc>, window_params = [{transform_indices = @transform_0, window_bounds = array<i64: 2, 4, 256>}, {pipeline_mode = #tpu.pipeline_mode<synchronous>, transform_indices = @transform_1, window_bounds = array<i64: 1, 4>}, {transform_indices = @transform_2, window_bounds = array<i64: 1, 1>}, {transform_indices = @transform_3, window_bounds = array<i64: 2, 1>}]} {
    %c0 = arith.constant 0 : index
    %c0_0 = arith.constant 0 : index
    %c0_1 = arith.constant 0 : index
    %0 = vector.load %arg1[%c0, %c0_0, %c0_1] : memref<2x4x256xf32, #tpu.memory_space<vmem>>, vector<2x4x256xf32>
    %cst = arith.constant dense<0xFF800000> : vector<2x4xf32>
    %1 = vector.multi_reduction <maximumf>, %0, %cst [2] : vector<2x4x256xf32> to vector<2x4xf32>
    %c0_2 = arith.constant 0 : index
    %c0_3 = arith.constant 0 : index
    %2 = vector.load %arg2[%c0_2, %c0_3] : memref<1x4xf32, #tpu.memory_space<vmem>>, vector<1x4xf32>
    %3 = vector.broadcast %2 : vector<1x4xf32> to vector<2x4xf32>
    %4 = arith.mulf %1, %3 : vector<2x4xf32>
    %cst_4 = arith.constant dense<0.000000e+00> : vector<2xf32>
    %5 = vector.multi_reduction <add>, %4, %cst_4 [1] : vector<2x4xf32> to vector<2xf32>
    %6 = vector.shape_cast %5 : vector<2xf32> to vector<2x1xf32>
    %c0_5 = arith.constant 0 : index
    %c0_6 = arith.constant 0 : index
    %7 = memref.load %arg3[%c0_5, %c0_6] : memref<1x1xf32, #tpu.memory_space<smem>>
    %8 = vector.broadcast %7 : f32 to vector<2x1xf32>
    %9 = arith.addf %6, %8 : vector<2x1xf32>
    %c0_7 = arith.constant 0 : index
    %c0_8 = arith.constant 0 : index
    %10 = vector.load %arg4[%c0_7, %c0_8] : memref<2x1xf32, #tpu.memory_space<vmem>>, vector<2x1xf32>
    tpu.vector_store %arg4[%c0_7, %c0_8], %9 {strides = array<i32>} : memref<2x1xf32, #tpu.memory_space<vmem>>, vector<2x1xf32>,
    return
  }
  func.func @transform_0(%arg0: i32) -> (i32, i32, i32) {
    %c0_i32 = arith.constant 0 : i32
    %c0_i32_0 = arith.constant 0 : i32
    %c0_i32_1 = arith.constant 0 : i32
    return %arg0, %c0_i32, %c0_i32_0 : i32, i32, i32
  }
  func.func @transform_1(%arg0: i32) -> (i32, i32) {
    %c0_i32 = arith.constant 0 : i32
    %c0_i32_0 = arith.constant 0 : i32
    %c0_i32_1 = arith.constant 0 : i32
    return %c0_i32, %c0_i32_0 : i32, i32
  }
  func.func @transform_2(%arg0: i32) -> (i32, i32) {
    %c0_i32 = arith.constant 0 : i32
    %c0_i32_0 = arith.constant 0 : i32
    %c0_i32_1 = arith.constant 0 : i32
    return %c0_i32, %c0_i32_0 : i32, i32
  }
  func.func @transform_3(%arg0: i32) -> (i32, i32) {
    %c0_i32 = arith.constant 0 : i32
    %c0_i32_0 = arith.constant 0 : i32
    return %arg0, %c0_i32 : i32, i32
  }
}

</mosaic_0001>

<llo_original>
// kernel: tpu_custom_call.1
$region0: #{tpu_custom_call.1}
  #allocation0 [shape = 'u32[]', space=smem, size = 0x4, offset = 0x4, fixed_abs, tag = 'smem constant byte address 0x4 - core index']
  #allocation1 [shape = 'u32[144,128]{1,0:T(1,128)}', space=vmem, size = 0x12000, scoped, tag = 'internal scratch']
  #allocation2 [shape = 'f32[1,1]{1,0:T(1,128)S(6)}', space=smem, size = 0x200, scoped, tag = 'scoped memory for tpu_custom_call.1']
  %s0 = inlined_call_operand.hbm [shape: f32[2,4,256], index: 0, kind: input, shape index: {}]
  %s1 = inlined_call_operand.vmem [shape: f32[1,4], index: 1, kind: input, shape index: {}]
  %s2 = inlined_call_operand.<no memory space> [shape: f32[1,1], index: 2, kind: input, shape index: {}]
  %s3 = inlined_call_operand.vmem [shape: f32[2,1], index: 3, kind: output, shape index: {}]
  %s4 = sld [smem:[#allocation0]]
  $region26: #{tpu_custom_call.1} parent=0
    _
  %s6 = ssub.s32 1, %s4
  %s7 = scalar_select 0, %s6, %s4
  %8 = sst [smem:[#allocation2]] %s2
  $region1: #{tpu_custom_call.1} parent=0
    #allocation3 [shape = 'u8[8192]{0}', space=vmem, size = 0x2000, scoped, tag = 'input window, operand 0, single buffered']
    #allocation4 [shape = 's32[1]{0}', space=sflag, size = 0x4, scoped, tag = 'scoped memory for tpu_custom_call.1']
    %9 = vsyncpa [#allocation4], 0
    // Predicated region
    $region2: #{tpu_custom_call.1} parent=1 // pred_check
      _
    $region3: #{tpu_custom_call.1} parent=1 // pred_check_branch
      %11 = sbr.rel (0) target = $region5
    $region4: #{tpu_custom_call.1} parent=1 // pred_region
      %s13 = ssub.s32 256, 256
      %14 = vsyncadd [#allocation4], %s13
      %s15 = sshll.u32 [#allocation3], 4
      %s16 = int_to_ptr.vmem [resolvable:$true] %s15
      %21 = dma.hbm_to_vmem [thread:$0]  %s0, 256, %s16, [#allocation4], 128, 128, 8
    $region5: #{tpu_custom_call.1} parent=1 // pred_fallthru
      _
    // Predicated region
    $region6: #{tpu_custom_call.1} parent=1 // pred_check
      _
    $region7: #{tpu_custom_call.1} parent=1 // pred_check_branch
      %23 = sbr.rel (0) target = $region9
    $region8: #{tpu_custom_call.1} parent=1 // pred_region
      _
    $region9: #{tpu_custom_call.1} parent=1 // pred_fallthru
      _
    // Predicated region
    $region10: #{tpu_custom_call.1} parent=1 // pred_check
      _
    $region11: #{tpu_custom_call.1} parent=1 // pred_check_branch
      %25 = sbr.rel (0) target = $region13
    $region12: #{tpu_custom_call.1} parent=1 // pred_region
      _
    $region13: #{tpu_custom_call.1} parent=1 // pred_fallthru
      _
    // Predicated region
    $region14: #{tpu_custom_call.1} parent=1 // pred_check
      _
    $region15: #{tpu_custom_call.1} parent=1 // pred_check_branch
      %27 = sbr.rel (0) target = $region17
    $region16: #{tpu_custom_call.1} parent=1 // pred_region
      %28 = dma.done [#allocation4], 256
    $region17: #{tpu_custom_call.1} parent=1 // pred_fallthru
      _
    %v29 = vld [vmem:[#allocation3] sm:$0xff]
    %v30 = vld [vmem:[#allocation3 + $0x8] sm:$0xff]
    %v33 = vcombine.high %v29, %v29
    %v34 = vcombine.high %v30, %v30
    %vm37 = vcmask 1043456
    %v38 = vsel %vm37, %v29, -inf
    %v39 = vsel %vm37, %v33, -inf
    %v40 = vmax.f32 %v38, %v39
    %41 = vmax.xlane.f32.xlu0 %v40
    %v42 = vpop.xlane.xlu0 %41
    %v43 = vsel %vm37, %v30, -inf
    %v44 = vsel %vm37, %v34, -inf
    %v45 = vmax.f32 %v43, %v44
    %46 = vmax.xlane.f32.xlu0 %v45
    %v47 = vpop.xlane.xlu0 %46
    %v48 = vld [vmem:[%s1] sm:$0x1]
    %v50 = vlaneseq
    %v51 = vshrl.u32 %v50, 7
    %v52 = vsub.s32 0, %v51
    %v53 = vrot.slane %v48, %v52
    %55 = vbcast.lane.b32.xlu0 %v53, 256
    %v56 = vpop.permute.xlu0 %55
    %v58 = vmul.f32 %v42, %v56
    %v59 = vmul.f32 %v47, %v56
    %62 = vset.pattern.permute.xlu0 0
    %63 = vperm.xlu0 %62, %v58
    %v64 = vpop.permute.xlu0 %63
    %65 = vset.pattern.permute.xlu0 0
    %66 = vperm.xlu0 %65, %v59
    %v67 = vpop.permute.xlu0 %66
    %v68 = vlaneseq
    %v69 = vand.u32 %v68, 127
    %v70 = vlaneseq
    %v71 = vshrl.u32 %v70, 7
    %v72 = vsub.s32 %v69, %v71
    %v73 = vrot.slane %v64, %v72
    %v74 = vlaneseq
    %v75 = vshrl.u32 %v74, 7
    %v76 = vsub.s32 %v69, %v75
    %v77 = vrot.slane %v67, %v76
    %vm78 = vcmask 1041409
    %v79 = vsel %vm78, %v77, %v73
    %vm81 = vcmask 25600
    %v82 = vsel %vm81, %v79, 0.0
    %83 = vadd.xlane.f32.xlu0 %v82
    %v84 = vpop.xlane.xlu0 %83
    %s85 = sld [smem:[#allocation2]]
    %v86 = vstv %s85
    %v87 = vadd.f32 %v84, %v86
    %vm88 = vcmask 1024
    %89 = vst.msk [vmem:[%s3] sm:$0x3] %vm88, %v87
    // Predicated region
    $region18: #{tpu_custom_call.1} parent=1 // pred_check
      _
    $region19: #{tpu_custom_call.1} parent=1 // pred_check_branch
      %91 = sbr.rel (0) target = $region21
    $region20: #{tpu_custom_call.1} parent=1 // pred_region
      _
    $region21: #{tpu_custom_call.1} parent=1 // pred_fallthru
      _
    // Predicated region
    $region22: #{tpu_custom_call.1} parent=1 // pred_check
      _
    $region23: #{tpu_custom_call.1} parent=1 // pred_check_branch
      %93 = sbr.rel (0) target = $region25
    $region24: #{tpu_custom_call.1} parent=1 // pred_region
      _
    $region25: #{tpu_custom_call.1} parent=1 // pred_fallthru
      _
    %94 = vsyncpa [#allocation4], 1

</llo_original>
